<compile_context>
chip_gen: v5e
topology: v5e:2x2
jax: 0.10.0
libtpu: 0.0.40
codegen_flags: <defaults>
</compile_context>

<pallas_src>
import math

import jax
import jax.numpy as jnp
import numpy as np
from jax import lax
from jax.experimental import pallas as pl
from jax.experimental.pallas import tpu as pltpu


def st_gcnn_kernel(x_ref, x0_ref, z_ref, a1_ref, b_ref, slope_ref, o_ref):
    # x_ref : (N*C,      TV)   stacked per-batch activations (channels on sublanes)
    # x0_ref: (N*(C0+1), TV)   stacked x0 with an all-ones row per batch (bias)
    # z_ref : (TV, TV)         graph/temporal mixing matrix Z
    # a1_ref: (N*C, N*C)       block-diag (1-alpha)*A
    # b_ref : (N*C, N*(C0+1))  block-diag [alpha*A*W2' | alpha*A*h2 + ht]
    # slope_ref: (1, 1) in SMEM  (PReLU slope)
    x = x_ref[...]

    # u = A1 @ x      (tiny channel contraction, all batches at once)
    u = jnp.dot(a1_ref[...], x, preferred_element_type=jnp.float32)

    # y = u @ Z^T     (the one "real" matmul: TV x TV)
    y = lax.dot_general(u, z_ref[...],
                        dimension_numbers=(((1,), (1,)), ((), ())),
                        preferred_element_type=jnp.float32)

    # + B_aug @ x0_aug   (residual2 conv+BN, GCNII alpha-mix and all shifts, folded)
    y = y + jnp.dot(b_ref[...], x0_ref[...], preferred_element_type=jnp.float32)

    # identity residual branch (stride==1, in_channels==out_channels)
    y = y + x

    # PReLU with a single shared slope read from SMEM
    slope = slope_ref[0, 0]
    o_ref[...] = jnp.where(y > 0, y, y * slope)


def st_gcnn_forward(x, x0, params, lamda, alpha, l):
    N, C, T, V = x.shape
    C0 = x0.shape[1]
    TV = T * V
    Cout = params["convt_w"].shape[0]
    assert Cout == C, "identity residual path requires in_channels == out_channels"
    theta = float(math.log(lamda / l + 1))
    alpha = float(alpha)
    eps = 1e-5

    # ---- host-side folding: BN (eval) + conv bias into weights/shifts --------
    s2 = params["bn2_gamma"] / jnp.sqrt(params["bn2_var"] + eps)
    w2p = s2[:, None] * params["conv2_w"]                                   # (C, C0)
    h2 = (params["conv2_b"] - params["bn2_mean"]) * s2 + params["bn2_beta"]  # (C,)
    st_ = params["bnt_gamma"] / jnp.sqrt(params["bnt_var"] + eps)
    wtp = st_[:, None] * params["convt_w"]                                  # (Cout, C)
    ht = (params["convt_b"] - params["bnt_mean"]) * st_ + params["bnt_beta"]  # (Cout,)

    # ---- host-side folding of the whole linear chain --------------------------
    wg_eff = theta * params["Wg"].T + (1.0 - theta) * jnp.eye(C, dtype=jnp.float32)
    A = wtp @ wg_eff                       # (Cout, C)
    A1 = (1.0 - alpha) * A                 # applied to x @ Z^T
    B = alpha * (A @ w2p)                  # (Cout, C0), applied to x0
    c = alpha * (A @ h2) + ht              # (Cout,), total additive shift
    b_aug = jnp.concatenate([B, c[:, None]], axis=1)   # (Cout, C0+1)

    # ---- fold the batch dimension into sublanes (block-diagonal weights) -----
    eye_n = jnp.eye(N, dtype=jnp.float32)
    a1_bd = jnp.kron(eye_n, A1.astype(jnp.float32))    # (N*Cout, N*C)
    b_bd = jnp.kron(eye_n, b_aug.astype(jnp.float32))  # (N*Cout, N*(C0+1))

    x_all = x.reshape(N * C, TV).astype(jnp.float32)
    x0_aug = jnp.concatenate(
        [x0.reshape(N, C0, TV).astype(jnp.float32),
         jnp.ones((N, 1, TV), jnp.float32)],
        axis=1,
    ).reshape(N * (C0 + 1), TV)

    slope = params["prelu_a"].reshape(1, 1).astype(jnp.float32)

    NC = N * C
    NC0A = N * (C0 + 1)

    out = pl.pallas_call(
        st_gcnn_kernel,
        out_shape=jax.ShapeDtypeStruct((NC, TV), jnp.float32),
        grid_spec=pltpu.PrefetchScalarGridSpec(
            num_scalar_prefetch=0,
            grid=(1,),
            in_specs=[
                pl.BlockSpec((NC, TV), lambda i: (0, 0)),        # x (all batches)
                pl.BlockSpec((NC0A, TV), lambda i: (0, 0)),      # x0 augmented
                pl.BlockSpec((TV, TV), lambda i: (0, 0)),        # Z
                pl.BlockSpec((NC, NC), lambda i: (0, 0)),        # block-diag A1
                pl.BlockSpec((NC, NC0A), lambda i: (0, 0)),      # block-diag [B | c]
                pl.BlockSpec(memory_space=pltpu.MemorySpace.SMEM),  # PReLU slope
            ],
            out_specs=pl.BlockSpec((NC, TV), lambda i: (0, 0)),
        ),
        compiler_params=pltpu.CompilerParams(dimension_semantics=("arbitrary",)),
    )(x_all, x0_aug, params["Z"].astype(jnp.float32), a1_bd, b_bd, slope)

    return out.reshape(N, Cout, T, V)


def reference_forward(x, x0, params, lamda, alpha, l):
    """Pure-JAX mirror of the PyTorch forward (eval-mode BN / Dropout)."""
    N, C, T, V = x.shape
    eps = 1e-5
    res = x  # residual = Identity (stride==1, in_ch==out_ch)

    # residual2: 1x1 conv + BN
    b = params["conv2_b"][None, :, None, None]
    x0c = jnp.einsum("oc,nchw->nohw", params["conv2_w"], x0) + b
    x0c = ((x0c - params["bn2_mean"][None, :, None, None])
           / jnp.sqrt(params["bn2_var"] + eps)[None, :, None, None]
           * params["bn2_gamma"][None, :, None, None]
           + params["bn2_beta"][None, :, None, None])

    # gcn (GCNII propagation)
    xm = x.reshape(N, C, T * V).transpose(0, 2, 1)
    h0 = x0c.reshape(N, C, T * V).transpose(0, 2, 1)
    theta = math.log(lamda / l + 1)
    hi = jnp.einsum("ij,njc->nic", params["Z"], xm)
    support = (1 - alpha) * hi + alpha * h0
    out = theta * (support @ params["Wg"]) + (1 - theta) * support
    out = out.transpose(0, 2, 1).reshape(N, C, T, V)

    # tcn: 1x1 conv + BN (+ identity dropout)
    y = jnp.einsum("oc,nchw->nohw", params["convt_w"], out) \
        + params["convt_b"][None, :, None, None]
    y = ((y - params["bnt_mean"][None, :, None, None])
         / jnp.sqrt(params["bnt_var"] + eps)[None, :, None, None]
         * params["bnt_gamma"][None, :, None, None]
         + params["bnt_beta"][None, :, None, None])

    y = y + res
    a = params["prelu_a"].reshape(())
    return jnp.where(y > 0, y, a * y)


if __name__ == "__main__":
    # Small shapes consistent with the module:
    #   N=2 batch, C=4 in/out channels, C0=6 "x0" channels, T=8 frames, V=16 joints.
    N, C, C0, T, V = 2, 4, 6, 8, 16
    TV = T * V
    lamda, alpha, l = 0.5, 0.1, 2

    key = jax.random.PRNGKey(0)
    ks = jax.random.split(key, 16)

    x = jax.random.normal(ks[0], (N, C, T, V), dtype=jnp.float32)
    x0 = jax.random.normal(ks[1], (N, C0, T, V), dtype=jnp.float32)

    stdv_z = 1.0 / math.sqrt(T)
    stdv_w = 1.0 / math.sqrt(C)
    params = {
        # ConvTemporalGraphical
        "Z": jax.random.uniform(ks[2], (TV, TV), jnp.float32, -stdv_z, stdv_z),
        "Wg": jax.random.uniform(ks[3], (C, C), jnp.float32, -stdv_w, stdv_w),
        # residual2: Conv2d(C0 -> C, 1x1) + BatchNorm2d(C)
        "conv2_w": jax.random.uniform(ks[4], (C, C0), jnp.float32, -0.3, 0.3),
        "conv2_b": jax.random.uniform(ks[5], (C,), jnp.float32, -0.1, 0.1),
        "bn2_gamma": 1.0 + 0.1 * jax.random.normal(ks[6], (C,), jnp.float32),
        "bn2_beta": 0.05 * jax.random.normal(ks[7], (C,), jnp.float32),
        "bn2_mean": 0.1 * jax.random.normal(ks[8], (C,), jnp.float32),
        "bn2_var": jax.random.uniform(ks[9], (C,), jnp.float32, 0.5, 1.5),
        # tcn: Conv2d(C -> C, 1x1) + BatchNorm2d(C)
        "convt_w": jax.random.uniform(ks[10], (C, C), jnp.float32, -0.5, 0.5),
        "convt_b": jax.random.uniform(ks[11], (C,), jnp.float32, -0.1, 0.1),
        "bnt_gamma": 1.0 + 0.1 * jax.random.normal(ks[12], (C,), jnp.float32),
        "bnt_beta": 0.05 * jax.random.normal(ks[13], (C,), jnp.float32),
        "bnt_mean": 0.1 * jax.random.normal(ks[14], (C,), jnp.float32),
        "bnt_var": jax.random.uniform(ks[15], (C,), jnp.float32, 0.5, 1.5),
        # PReLU (default single parameter, init 0.25)
        "prelu_a": jnp.array([0.25], dtype=jnp.float32),
    }

    out = st_gcnn_forward(x, x0, params, lamda, alpha, l)
    out = jax.block_until_ready(out)

    ref = jax.block_until_ready(reference_forward(x, x0, params, lamda, alpha, l))
    np.testing.assert_allclose(np.asarray(out), np.asarray(ref), rtol=1e-4, atol=1e-4)

    print("KERNEL_OK")
</pallas_src>

<mosaic_0001>
module attributes {stable_mosaic.version = 11 : i64} {
  func.func @st_gcnn_kernel(%arg0: i32, %arg1: memref<8x128xf32, #tpu.memory_space<vmem>>, %arg2: memref<14x128xf32, #tpu.memory_space<vmem>>, %arg3: memref<128x128xf32, #tpu.memory_space<vmem>>, %arg4: memref<8x8xf32, #tpu.memory_space<vmem>>, %arg5: memref<8x14xf32, #tpu.memory_space<vmem>>, %arg6: memref<1x1xf32, #tpu.memory_space<smem>>, %arg7: memref<8x128xf32, #tpu.memory_space<vmem>>) attributes {dimension_semantics = [#tpu.dimension_semantics<arbitrary>], iteration_bounds = array<i64: 1>, scalar_prefetch = 0 : i64, scratch_operands = 0 : i64, tpu.core_type = #tpu.core_type<tc>, window_params = [{pipeline_mode = #tpu.pipeline_mode<synchronous>, transform_indices = @transform_0, window_bounds = array<i64: 8, 128>}, {pipeline_mode = #tpu.pipeline_mode<synchronous>, transform_indices = @transform_1, window_bounds = array<i64: 14, 128>}, {pipeline_mode = #tpu.pipeline_mode<synchronous>, transform_indices = @transform_2, window_bounds = array<i64: 128, 128>}, {pipeline_mode = #tpu.pipeline_mode<synchronous>, transform_indices = @transform_3, window_bounds = array<i64: 8, 8>}, {pipeline_mode = #tpu.pipeline_mode<synchronous>, transform_indices = @transform_4, window_bounds = array<i64: 8, 14>}, {transform_indices = @transform_5, window_bounds = array<i64: 1, 1>}, {pipeline_mode = #tpu.pipeline_mode<synchronous>, transform_indices = @transform_6, window_bounds = array<i64: 8, 128>}]} {
    %c0 = arith.constant 0 : index
    %c0_0 = arith.constant 0 : index
    %0 = vector.load %arg1[%c0, %c0_0] : memref<8x128xf32, #tpu.memory_space<vmem>>, vector<8x128xf32>
    %c0_1 = arith.constant 0 : index
    %c0_2 = arith.constant 0 : index
    %1 = vector.load %arg4[%c0_1, %c0_2] : memref<8x8xf32, #tpu.memory_space<vmem>>, vector<8x8xf32>
    %cst = arith.constant dense<0.000000e+00> : vector<8x128xf32>
    %2 = tpu.matmul %1, %0, %cst {dimension_numbers = #tpu.dot_dimension_numbers<[1], [0], [0], [1], [0, 0, 1, 1], [], []>} : vector<8x8xf32>, vector<8x128xf32>, vector<8x128xf32> -> vector<8x128xf32>
    %c0_3 = arith.constant 0 : index
    %c0_4 = arith.constant 0 : index
    %3 = vector.load %arg3[%c0_3, %c0_4] : memref<128x128xf32, #tpu.memory_space<vmem>>, vector<128x128xf32>
    %cst_5 = arith.constant dense<0.000000e+00> : vector<8x128xf32>
    %4 = tpu.matmul %2, %3, %cst_5 {dimension_numbers = #tpu.dot_dimension_numbers<[1], [1], [0], [0], [0, 0, 1, 0], [], []>} : vector<8x128xf32>, vector<128x128xf32>, vector<8x128xf32> -> vector<8x128xf32>
    %c0_6 = arith.constant 0 : index
    %c0_7 = arith.constant 0 : index
    %5 = vector.load %arg5[%c0_6, %c0_7] : memref<8x14xf32, #tpu.memory_space<vmem>>, vector<8x14xf32>
    %c0_8 = arith.constant 0 : index
    %c0_9 = arith.constant 0 : index
    %6 = vector.load %arg2[%c0_8, %c0_9] : memref<14x128xf32, #tpu.memory_space<vmem>>, vector<14x128xf32>
    %cst_10 = arith.constant dense<0.000000e+00> : vector<8x128xf32>
    %7 = tpu.matmul %5, %6, %cst_10 {dimension_numbers = #tpu.dot_dimension_numbers<[1], [0], [0], [1], [0, 0, 1, 1], [], []>} : vector<8x14xf32>, vector<14x128xf32>, vector<8x128xf32> -> vector<8x128xf32>
    %8 = arith.addf %4, %7 : vector<8x128xf32>
    %9 = arith.addf %8, %0 : vector<8x128xf32>
    %c0_11 = arith.constant 0 : index
    %c0_12 = arith.constant 0 : index
    %10 = memref.load %arg6[%c0_11, %c0_12] : memref<1x1xf32, #tpu.memory_space<smem>>
    %cst_13 = arith.constant 0.000000e+00 : f32
    %11 = vector.broadcast %cst_13 : f32 to vector<8x128xf32>
    %12 = arith.cmpf ogt, %9, %11 : vector<8x128xf32>
    %13 = vector.broadcast %10 : f32 to vector<8x128xf32>
    %14 = arith.mulf %9, %13 : vector<8x128xf32>
    %15 = arith.select %12, %9, %14 : vector<8x128xi1>, vector<8x128xf32>
    %c0_14 = arith.constant 0 : index
    %c0_15 = arith.constant 0 : index
    %16 = vector.load %arg7[%c0_14, %c0_15] : memref<8x128xf32, #tpu.memory_space<vmem>>, vector<8x128xf32>
    tpu.vector_store %arg7[%c0_14, %c0_15], %15 {strides = array<i32>} : memref<8x128xf32, #tpu.memory_space<vmem>>, vector<8x128xf32>,
    return
  }
  func.func @transform_0(%arg0: i32) -> (i32, i32) {
    %c0_i32 = arith.constant 0 : i32
    %c0_i32_0 = arith.constant 0 : i32
    %c0_i32_1 = arith.constant 0 : i32
    return %c0_i32, %c0_i32_0 : i32, i32
  }
  func.func @transform_1(%arg0: i32) -> (i32, i32) {
    %c0_i32 = arith.constant 0 : i32
    %c0_i32_0 = arith.constant 0 : i32
    %c0_i32_1 = arith.constant 0 : i32
    return %c0_i32, %c0_i32_0 : i32, i32
  }
  func.func @transform_2(%arg0: i32) -> (i32, i32) {
    %c0_i32 = arith.constant 0 : i32
    %c0_i32_0 = arith.constant 0 : i32
    %c0_i32_1 = arith.constant 0 : i32
    return %c0_i32, %c0_i32_0 : i32, i32
  }
  func.func @transform_3(%arg0: i32) -> (i32, i32) {
    %c0_i32 = arith.constant 0 : i32
    %c0_i32_0 = arith.constant 0 : i32
    %c0_i32_1 = arith.constant 0 : i32
    return %c0_i32, %c0_i32_0 : i32, i32
  }
  func.func @transform_4(%arg0: i32) -> (i32, i32) {
    %c0_i32 = arith.constant 0 : i32
    %c0_i32_0 = arith.constant 0 : i32
    %c0_i32_1 = arith.constant 0 : i32
    return %c0_i32, %c0_i32_0 : i32, i32
  }
  func.func @transform_5(%arg0: i32) -> (i32, i32) {
    %c0_i32 = arith.constant 0 : i32
    %c0_i32_0 = arith.constant 0 : i32
    %c0_i32_1 = arith.constant 0 : i32
    return %c0_i32, %c0_i32_0 : i32, i32
  }
  func.func @transform_6(%arg0: i32) -> (i32, i32) {
    %c0_i32 = arith.constant 0 : i32
    %c0_i32_0 = arith.constant 0 : i32
    %c0_i32_1 = arith.constant 0 : i32
    return %c0_i32, %c0_i32_0 : i32, i32
  }
}

</mosaic_0001>

<llo_original>
// kernel: tpu_custom_call.1
$region0: #{tpu_custom_call.1}
  #allocation0 [shape = 'u32[]', space=smem, size = 0x4, offset = 0x4, fixed_abs, tag = 'smem constant byte address 0x4 - core index']
  #allocation1 [shape = 'u32[72,128]{1,0:T(1,128)}', space=vmem, size = 0x9000, scoped, tag = 'internal scratch']
  #allocation2 [shape = 'f32[1,1]{1,0:T(1,128)S(6)}', space=smem, size = 0x200, scoped, tag = 'scoped memory for tpu_custom_call.1']
  %s0 = inlined_call_operand.hbm [shape: f32[8,128], index: 0, kind: input, shape index: {}]
  %s1 = inlined_call_operand.hbm [shape: f32[14,128], index: 1, kind: input, shape index: {}]
  %s2 = inlined_call_operand.hbm [shape: f32[128,128], index: 2, kind: input, shape index: {}]
  %s3 = inlined_call_operand.hbm [shape: f32[8,8], index: 3, kind: input, shape index: {}]
  %s4 = inlined_call_operand.hbm [shape: f32[8,14], index: 4, kind: input, shape index: {}]
  %s5 = inlined_call_operand.<no memory space> [shape: f32[1,1], index: 5, kind: input, shape index: {}]
  %s6 = inlined_call_operand.hbm [shape: f32[8,128], index: 6, kind: output, shape index: {}]
  %s7 = sld [smem:[#allocation0]]
  $region54: #{tpu_custom_call.1} parent=0
    _
  %s9 = ssub.s32 1, %s7
  %s10 = scalar_select 0, %s9, %s7
  %11 = sst [smem:[#allocation2]] %s5
  $region1: #{tpu_custom_call.1} parent=0
    #allocation3 [shape = 'u8[4096]{0}', space=vmem, size = 0x1000, scoped, tag = 'input window, operand 0, single buffered']
    #allocation4 [shape = 's32[1]{0}', space=sflag, size = 0x4, scoped, tag = 'scoped memory for tpu_custom_call.1']
    #allocation5 [shape = 's32[1]{0}', space=sflag, size = 0x4, scoped, tag = 'scoped memory for tpu_custom_call.1']
    #allocation6 [shape = 'u8[8192]{0}', space=vmem, size = 0x2000, scoped, tag = 'input window, operand 1, single buffered']
    #allocation7 [shape = 's32[1]{0}', space=sflag, size = 0x4, scoped, tag = 'scoped memory for tpu_custom_call.1']
    #allocation8 [shape = 'u8[65536]{0}', space=vmem, size = 0x10000, scoped, tag = 'input window, operand 2, single buffered']
    #allocation9 [shape = 'u8[4096]{0}', space=vmem, size = 0x1000, scoped, tag = 'input window, operand 3, single buffered']
    #allocation10 [shape = 's32[1]{0}', space=sflag, size = 0x4, scoped, tag = 'scoped memory for tpu_custom_call.1']
    #allocation11 [shape = 'u8[4096]{0}', space=vmem, size = 0x1000, scoped, tag = 'input window, operand 4, single buffered']
    #allocation12 [shape = 'u8[4096]{0}', space=vmem, size = 0x1000, scoped, tag = 'output window, operand 0, single buffered']
    %12 = vsyncpa [#allocation4], 0
    %13 = vsyncpa [#allocation7], 0
    %14 = vsyncpa [#allocation10], 0
    %15 = vsyncpa [#allocation5], 0
    // Predicated region
    $region2: #{tpu_custom_call.1} parent=1 // pred_check
      _
    $region3: #{tpu_custom_call.1} parent=1 // pred_check_branch
      %17 = sbr.rel (0) target = $region5
    $region4: #{tpu_custom_call.1} parent=1 // pred_region
      %19 = vsyncadd [#allocation4], 0
      %s21 = sshll.u32 %s0, 4
      %s22 = int_to_ptr.hbm [resolvable:$true] %s21
      %s23 = sshll.u32 [#allocation3], 4
      %s24 = int_to_ptr.vmem [resolvable:$true] %s23
      %26 = dma.hbm_to_vmem [thread:$0]  %s22, 128, %s24, [#allocation4]
    $region5: #{tpu_custom_call.1} parent=1 // pred_fallthru
      _
    // Predicated region
    $region6: #{tpu_custom_call.1} parent=1 // pred_check
      _
    $region7: #{tpu_custom_call.1} parent=1 // pred_check_branch
      %28 = sbr.rel (0) target = $region9
    $region8: #{tpu_custom_call.1} parent=1 // pred_region
      %30 = vsyncadd [#allocation7], 0
      %s31 = sshll.u32 %s1, 4
      %s32 = int_to_ptr.hbm [resolvable:$true] %s31
      %s33 = sshll.u32 [#allocation6], 4
      %s34 = int_to_ptr.vmem [resolvable:$true] %s33
      %39 = dma.hbm_to_vmem [thread:$0]  %s32, 256, %s34, [#allocation7], 128, 128, 8
    $region9: #{tpu_custom_call.1} parent=1 // pred_fallthru
      _
    // Predicated region
    $region10: #{tpu_custom_call.1} parent=1 // pred_check
      _
    $region11: #{tpu_custom_call.1} parent=1 // pred_check_branch
      %41 = sbr.rel (0) target = $region13
    $region12: #{tpu_custom_call.1} parent=1 // pred_region
      %43 = vsyncadd [#allocation7], 0
      %s44 = sshll.u32 %s2, 4
      %s45 = int_to_ptr.hbm [resolvable:$true] %s44
      %s46 = sshll.u32 [#allocation8], 4
      %s47 = int_to_ptr.vmem [resolvable:$true] %s46
      %52 = dma.hbm_to_vmem [thread:$0]  %s45, 2048, %s47, [#allocation7], 128, 128, 8
    $region13: #{tpu_custom_call.1} parent=1 // pred_fallthru
      _
    // Predicated region
    $region14: #{tpu_custom_call.1} parent=1 // pred_check
      _
    $region15: #{tpu_custom_call.1} parent=1 // pred_check_branch
      %54 = sbr.rel (0) target = $region17
    $region16: #{tpu_custom_call.1} parent=1 // pred_region
      %56 = vsyncadd [#allocation10], 0
      %s58 = sshll.u32 %s3, 4
      %s59 = int_to_ptr.hbm [resolvable:$true] %s58
      %s60 = sshll.u32 [#allocation9], 4
      %s61 = int_to_ptr.vmem [resolvable:$true] %s60
      %63 = dma.hbm_to_vmem [thread:$0]  %s59, 128, %s61, [#allocation10]
    $region17: #{tpu_custom_call.1} parent=1 // pred_fallthru
      _
    // Predicated region
    $region18: #{tpu_custom_call.1} parent=1 // pred_check
      _
    $region19: #{tpu_custom_call.1} parent=1 // pred_check_branch
      %65 = sbr.rel (0) target = $region21
    $region20: #{tpu_custom_call.1} parent=1 // pred_region
      %67 = vsyncadd [#allocation10], 0
      %s69 = sshll.u32 %s4, 4
      %s70 = int_to_ptr.hbm [resolvable:$true] %s69
      %s71 = sshll.u32 [#allocation11], 4
      %s72 = int_to_ptr.vmem [resolvable:$true] %s71
      %74 = dma.hbm_to_vmem [thread:$0]  %s70, 128, %s72, [#allocation10]
    $region21: #{tpu_custom_call.1} parent=1 // pred_fallthru
      _
    // Predicated region
    $region22: #{tpu_custom_call.1} parent=1 // pred_check
      _
    $region23: #{tpu_custom_call.1} parent=1 // pred_check_branch
      %76 = sbr.rel (0) target = $region25
    $region24: #{tpu_custom_call.1} parent=1 // pred_region
      _
    $region25: #{tpu_custom_call.1} parent=1 // pred_fallthru
      _
    // Predicated region
    $region26: #{tpu_custom_call.1} parent=1 // pred_check
      _
    $region27: #{tpu_custom_call.1} parent=1 // pred_check_branch
      %78 = sbr.rel (0) target = $region29
    $region28: #{tpu_custom_call.1} parent=1 // pred_region
      %80 = dma.done [#allocation4], 128
    $region29: #{tpu_custom_call.1} parent=1 // pred_fallthru
      _
    // Predicated region
    $region30: #{tpu_custom_call.1} parent=1 // pred_check
      _
    $region31: #{tpu_custom_call.1} parent=1 // pred_check_branch
      %82 = sbr.rel (0) target = $region33
    $region32: #{tpu_custom_call.1} parent=1 // pred_region
      %84 = dma.done [#allocation7], 256
    $region33: #{tpu_custom_call.1} parent=1 // pred_fallthru
      _
    // Predicated region
    $region34: #{tpu_custom_call.1} parent=1 // pred_check
      _
    $region35: #{tpu_custom_call.1} parent=1 // pred_check_branch
      %86 = sbr.rel (0) target = $region37
    $region36: #{tpu_custom_call.1} parent=1 // pred_region
      %88 = dma.done [#allocation7], 2048
    $region37: #{tpu_custom_call.1} parent=1 // pred_fallthru
      _
    // Predicated region
    $region38: #{tpu_custom_call.1} parent=1 // pred_check
      _
    $region39: #{tpu_custom_call.1} parent=1 // pred_check_branch
      %90 = sbr.rel (0) target = $region41
    $region40: #{tpu_custom_call.1} parent=1 // pred_region
      %92 = dma.done [#allocation10], 128
    $region41: #{tpu_custom_call.1} parent=1 // pred_fallthru
      _
    // Predicated region
    $region42: #{tpu_custom_call.1} parent=1 // pred_check
      _
    $region43: #{tpu_custom_call.1} parent=1 // pred_check_branch
      %94 = sbr.rel (0) target = $region45
    $region44: #{tpu_custom_call.1} parent=1 // pred_region
      %96 = dma.done [#allocation10], 128
    $region45: #{tpu_custom_call.1} parent=1 // pred_fallthru
      _
    %v97 = vld [vmem:[#allocation3] sm:$0xff]
    %v98 = vld [vmem:[#allocation9] sm:$0xff]
    %vm99 = vcmask 64512
    %v101 = vsel %vm99, %v98, 0
    %103 = vmatpush.msra.mxu0 0.0
    %104 = vmatpush.msra.mxu0 0.0
    %105 = vmatpush.msra.mxu0 0.0
    %106 = vmatpush.msra.mxu0 0.0
    %107 = vmatpush.msra.mxu0 0.0
    %108 = vmatpush.msra.mxu0 0.0
    %109 = vmatpush.msra.mxu0 0.0
    %110 = vmatpush.msra.mxu0 0.0
    %111 = vmatpush.msra.mxu0 0.0
    %112 = vmatpush.msra.mxu0 0.0
    %113 = vmatpush.msra.mxu0 0.0
    %114 = vmatpush.msra.mxu0 0.0
    %115 = vmatpush.msra.mxu0 0.0
    %116 = vmatpush.msra.mxu0 0.0
    %117 = vmatpush.msra.mxu0 0.0
    %118 = vmatpush.msra.mxu0 %v97
    %119 = vmatmul.f32.gmra.mxu0 %v101
    %v120 = vpop.f32.mrf.mxu0
    %v121 = vadd.f32 0.0, %v120
    %122 = vdwg.mxu0
    %v123 = vld [vmem:[#allocation8] sm:$0xff]
    %v124 = vld [vmem:[#allocation8 + $0x8] sm:$0xff]
    %v125 = vld [vmem:[#allocation8 + $0x10] sm:$0xff]
    %v126 = vld [vmem:[#allocation8 + $0x18] sm:$0xff]
    %v127 = vld [vmem:[#allocation8 + $0x20] sm:$0xff]
    %v128 = vld [vmem:[#allocation8 + $0x28] sm:$0xff]
    %v129 = vld [vmem:[#allocation8 + $0x30] sm:$0xff]
    %v130 = vld [vmem:[#allocation8 + $0x38] sm:$0xff]
    %v131 = vld [vmem:[#allocation8 + $0x40] sm:$0xff]
    %v132 = vld [vmem:[#allocation8 + $0x48] sm:$0xff]
    %v133 = vld [vmem:[#allocation8 + $0x50] sm:$0xff]
    %v134 = vld [vmem:[#allocation8 + $0x58] sm:$0xff]
    %v135 = vld [vmem:[#allocation8 + $0x60] sm:$0xff]
    %v136 = vld [vmem:[#allocation8 + $0x68] sm:$0xff]
    %v137 = vld [vmem:[#allocation8 + $0x70] sm:$0xff]
    %v138 = vld [vmem:[#allocation8 + $0x78] sm:$0xff]
    %v139 = vld [vmem:[#allocation11] sm:$0xff]
    %v140 = vld [vmem:[#allocation6] sm:$0xff]
    %v141 = vld [vmem:[#allocation6 + $0x8] sm:$0x3f]
    %vm142 = vcmask 113664
    %v144 = vsel %vm142, %v139, 0
    %vm146 = vcmask 1045504
    %v148 = vsel %vm146, %v141, 0
    %150 = vmatpush.msra.mxu0 0.0
    %151 = vmatpush.msra.mxu0 0.0
    %152 = vmatpush.msra.mxu0 0.0
    %153 = vmatpush.msra.mxu0 0.0
    %154 = vmatpush.msra.mxu0 0.0
    %155 = vmatpush.msra.mxu0 0.0
    %156 = vmatpush.msra.mxu0 0.0
    %157 = vmatpush.msra.mxu0 0.0
    %158 = vmatpush.msra.mxu0 0.0
    %159 = vmatpush.msra.mxu0 0.0
    %160 = vmatpush.msra.mxu0 0.0
    %161 = vmatpush.msra.mxu0 0.0
    %162 = vmatpush.msra.mxu0 0.0
    %163 = vmatpush.msra.mxu0 0.0
    %164 = vmatpush.msra.mxu0 %v148
    %165 = vmatpush.msra.mxu0 %v140
    %166 = vmatmul.f32.gmra.mxu0 %v144
    %v167 = vpop.f32.mrf.mxu0
    %v168 = vadd.f32 0.0, %v167
    %169 = vdwg.mxu0
    %170 = vmatpush.xpose.msra.mxu0 %v138
    %171 = vmatpush.xpose.msra.mxu0 %v137
    %172 = vmatpush.xpose.msra.mxu0 %v136
    %173 = vmatpush.xpose.msra.mxu0 %v135
    %174 = vmatpush.xpose.msra.mxu0 %v134
    %175 = vmatpush.xpose.msra.mxu0 %v133
    %176 = vmatpush.xpose.msra.mxu0 %v132
    %177 = vmatpush.xpose.msra.mxu0 %v131
    %178 = vmatpush.xpose.msra.mxu0 %v130
    %179 = vmatpush.xpose.msra.mxu0 %v129
    %180 = vmatpush.xpose.msra.mxu0 %v128
    %181 = vmatpush.xpose.msra.mxu0 %v127
    %182 = vmatpush.xpose.msra.mxu0 %v126
    %183 = vmatpush.xpose.msra.mxu0 %v125
    %184 = vmatpush.xpose.msra.mxu0 %v124
    %185 = vmatpush.xpose.msra.mxu0 %v123
    %186 = vmatmul.f32.gmra.mxu0 %v121
    %v187 = vpop.f32.mrf.mxu0
    %v188 = vadd.f32 %v168, %v187
    %189 = vdwg.mxu0
    %v190 = vadd.f32 %v188, %v97
    %s191 = sld [smem:[#allocation2]]
    %vm192 = vcmp.gt.f32.partialorder %v190, 0.0
    %v193 = vstv %s191
    %v194 = vmul.f32 %v190, %v193
    %v195 = vsel %vm192, %v190, %v194
    %196 = vst [vmem:[#allocation12] sm:$0xff] %v195
    // Predicated region
    $region46: #{tpu_custom_call.1} parent=1 // pred_check
      _
    $region47: #{tpu_custom_call.1} parent=1 // pred_check_branch
      %198 = sbr.rel (0) target = $region49
    $region48: #{tpu_custom_call.1} parent=1 // pred_region
      %200 = vsyncadd [#allocation5], 0
      %s202 = sshll.u32 [#allocation12], 4
      %s203 = int_to_ptr.vmem [resolvable:$true] %s202
      %s204 = sshll.u32 %s6, 4
      %s205 = int_to_ptr.hbm [resolvable:$true] %s204
      %207 = dma.vmem_to_hbm [thread:$0]  %s203, 128, %s205, [#allocation5]
    $region49: #{tpu_custom_call.1} parent=1 // pred_fallthru
      _
    // Predicated region
    $region50: #{tpu_custom_call.1} parent=1 // pred_check
      _
    $region51: #{tpu_custom_call.1} parent=1 // pred_check_branch
      %209 = sbr.rel (0) target = $region53
    $region52: #{tpu_custom_call.1} parent=1 // pred_region
      %211 = dma.done [#allocation5], 128
    $region53: #{tpu_custom_call.1} parent=1 // pred_fallthru
      _
    %212 = vsyncpa [#allocation4], 1
    %213 = vsyncpa [#allocation7], 1
    %214 = vsyncpa [#allocation10], 1
    %215 = vsyncpa [#allocation5], 1

</llo_original>
